<compile_context>
chip_gen: v7x
topology: tpu7x:2x2x1
jax: 0.10.0
libtpu: 0.0.40
codegen_flags: <defaults>
</compile_context>

<pallas_src>
import jax
import jax.numpy as jnp
from jax.experimental import pallas as pl
from jax.experimental.pallas import tpu as pltpu


def _pos_embedding_copy_kernel(pos_ref, out_ref, sem):
    # Single HBM->HBM DMA of the whole parameter; no VMEM round trip.
    cp = pltpu.make_async_copy(pos_ref, out_ref, sem)
    cp.start()
    cp.wait()


def bert_positional_embedding_forward(pos_embedding, x=None, *, materialize=True):
    """Pallas equivalent of BERTPositionalEmbedding.forward.

    Args:
        pos_embedding: (1, seq_length, hidden_dim) learnable parameter.
        x: ignored (kept only for API parity with the PyTorch module).
        materialize: if False, skip the kernel entirely and return the
            parameter directly (zero-cost identity path -- the recommended
            production path for this op).

    Returns:
        (1, seq_length, hidden_dim) array equal to pos_embedding.
    """
    if not materialize:
        # Identity path: forward(x) == pos_embedding, no copy needed.
        return pos_embedding

    _, seq_length, hidden_dim = pos_embedding.shape
    # Squeeze the size-1 batch dim: present a clean contiguous 2D slab to the DMA.
    pos_2d = pos_embedding.reshape(seq_length, hidden_dim)

    out_2d = pl.pallas_call(
        _pos_embedding_copy_kernel,
        out_shape=jax.ShapeDtypeStruct((seq_length, hidden_dim),
                                       pos_embedding.dtype),
        in_specs=[pl.BlockSpec(memory_space=pl.ANY)],
        out_specs=pl.BlockSpec(memory_space=pl.ANY),
        scratch_shapes=[pltpu.SemaphoreType.DMA(())],
    )(pos_2d)

    return out_2d.reshape(1, seq_length, hidden_dim)


if __name__ == "__main__":
    seq_length = 8
    hidden_dim = 32
    batch = 2

    key = jax.random.PRNGKey(0)
    k_pos, k_x = jax.random.split(key)

    # Deterministic parameter init, mirrors torch .normal_(std=0.02)
    pos_embedding = 0.02 * jax.random.normal(
        k_pos, (1, seq_length, hidden_dim), dtype=jnp.float32)

    # Example input (unused by the forward, exactly as in the PyTorch module)
    x = jax.random.normal(k_x, (batch, seq_length, hidden_dim),
                          dtype=jnp.float32)

    out = bert_positional_embedding_forward(pos_embedding, x)
    out = jax.block_until_ready(out)

    assert out.shape == (1, seq_length, hidden_dim)
    assert out.dtype == pos_embedding.dtype
    assert jnp.array_equal(out, pos_embedding)

    # Also exercise the zero-cost identity path.
    out_id = jax.block_until_ready(
        bert_positional_embedding_forward(pos_embedding, x, materialize=False))
    assert jnp.array_equal(out_id, pos_embedding)

    print("KERNEL_OK")
</pallas_src>

<mosaic_0001>
module attributes {stable_mosaic.version = 11 : i64} {
  func.func @_pos_embedding_copy_kernel(%arg0: memref<8x32xf32, #tpu.memory_space<any>>, %arg1: memref<8x32xf32, #tpu.memory_space<any>>, %arg2: memref<!tpu.dma_semaphore, #tpu.memory_space<semaphore_mem>>) attributes {dimension_semantics = [], scalar_prefetch = 0 : i64, scratch_operands = 1 : i64, tpu.core_type = #tpu.core_type<tc>} {
    tpu.enqueue_dma source(%arg0 : memref<8x32xf32, #tpu.memory_space<any>>) target(%arg1 : memref<8x32xf32, #tpu.memory_space<any>>) target_semaphore(%arg2 : memref<!tpu.dma_semaphore, #tpu.memory_space<semaphore_mem>>)
    tpu.wait_dma2 semaphore(%arg2 : memref<!tpu.dma_semaphore, #tpu.memory_space<semaphore_mem>>) src(%arg0 : memref<8x32xf32, #tpu.memory_space<any>>) dst(%arg1 : memref<8x32xf32, #tpu.memory_space<any>>)
    return
  }
}

</mosaic_0001>

<llo_original>
// kernel: tpu_custom_call.1
$region0: #{tpu_custom_call.1}
  #allocation0 [shape = 'u32[]', space=smem, size = 0x4, offset = 0x4, fixed_abs, tag = 'smem constant byte address 0x4 - core index']
  #allocation1 [shape = 'u32[144,128]{1,0:T(1,128)}', space=vmem, size = 0x12000, scoped, tag = 'internal scratch']
  #allocation2 [shape = 's32[1]{0}', space=sflag, size = 0x4, scoped, tag = 'scratch operand']
  #allocation3 [shape = 's32[]', space=sflag, size = 0x4, offset = 0, fixed_abs, tag = 'sflag constant byte address 0x0 - dummy sync flag']
  #allocation4 [shape = 'u32[0]{0}', space=smem, size = 0, offset = 0, fixed_abs, tag = 'smem constant byte address 0x0 - null']
  %s0 = inlined_call_operand.hbm [shape: f32[8,32], index: 0, kind: input, shape index: {}]
  %s1 = inlined_call_operand.hbm [shape: f32[8,32], index: 1, kind: output, shape index: {}]
  %s2 = sld [smem:[#allocation0]]
  $region2: #{tpu_custom_call.1} parent=0
    _
  %s4 = ssub.s32 1, %s2
  %s5 = scalar_select 0, %s4, %s2
  %s7 = sshll.u32 1, 14
  %s8 = sxor.u32 4294967295, %s7
  %s11 = sshll.u32 3, 24
  %s12 = sxor.u32 4294967295, %s11
  %s13 = sand.u32 0, %s12
  %s15 = sor.u32 %s13, 0
  %18 = dma.general %s0, 128, %s1, [#allocation2], [#allocation3], [#allocation4], %s15, 0
  %s19 = smul.u32 8, 1
  %s20 = sshll.u32 %s19, 4
  %21 = dma.done [#allocation2], %s20
  %22 = vsyncmov [#allocation2]
  %s23 = vpop.sfrf %22
  %p24 = scmp.eq.s32.totalorder %s23, 0
  %p25 = pneg %p24
  %27 = shalt.err (%p25)

</llo_original>
